<compile_context>
chip_gen: v7x
topology: tpu7x:2x2x1
jax: 0.10.0
libtpu: 0.0.40
codegen_flags: <defaults>
</compile_context>

<pallas_src>
import functools

import jax
import jax.numpy as jnp
import numpy as np
from jax.experimental import pallas as pl
from jax.experimental.pallas import tpu as pltpu


def map_head_kernel(x_ref, wscore_ref, bscore_ref, seg_hd_ref,
                    wv_ref, bv_ref, wo_ref, bo_ref,
                    ln_g_ref, ln_b_ref, w1_ref, b1_ref, w2_ref, b2_ref,
                    out_ref, *, eps, seq_len):
    Bt, S_pad, D = x_ref.shape
    x = x_ref[...].reshape(Bt * S_pad, D)        # pure re-indexing (S_pad sublane-aligned)

    # Attention scores with the K projection folded into a (D, H) matrix:
    #   s[b, s, h] = sum_{d in head h} q_scaled[d] * (x @ Wk.T + bk)[b, s, d]
    s = jnp.dot(x, wscore_ref[...], preferred_element_type=jnp.float32) + bscore_ref[...]
    H = s.shape[-1]
    s = s.reshape(Bt, S_pad, H)                  # (Bt, S_pad, H)
    if seq_len != S_pad:                         # static branch: mask padded positions
        pos = jax.lax.broadcasted_iota(jnp.int32, (Bt, S_pad, H), 1)
        s = jnp.where(pos < seq_len, s, -jnp.inf)

    # Softmax over the sequence axis, per (batch row, head).
    m = jnp.max(s, axis=1, keepdims=True)
    e = jnp.exp(s - m)
    denom = jnp.sum(e, axis=1, keepdims=True)    # (Bt, 1, H)
    p = e * pl.reciprocal(denom, approx=True)    # EUP reciprocal (free slot)

    # V projection WITHOUT bias: probabilities sum to 1 per head, so bv is added
    # once to the pooled (Bt, D) result instead of to the (Bt*S, D) tensor.
    v = jnp.dot(x, wv_ref[...], preferred_element_type=jnp.float32)              # (Bt*S, D)

    # Broadcast each head's prob across its dh lanes via the (H, D) segment
    # matrix, then VPU multiply + sublane reduce over S.
    p_lanes = jnp.dot(p.reshape(Bt * S_pad, H).astype(seg_hd_ref.dtype),
                      seg_hd_ref[...], preferred_element_type=jnp.float32)       # (Bt*S, D)
    attn = jnp.sum((p_lanes * v).reshape(Bt, S_pad, D), axis=1) + bv_ref[...]    # (Bt, D)

    # Attention output projection.
    attn_out = (jnp.dot(attn.astype(wo_ref.dtype), wo_ref[...],
                        preferred_element_type=jnp.float32) + bo_ref[...])       # (Bt, D)

    # LayerNorm over the feature dimension (f32).
    mean = jnp.mean(attn_out, axis=-1, keepdims=True)
    var = jnp.mean(jnp.square(attn_out - mean), axis=-1, keepdims=True)
    y = ((attn_out - mean) * jax.lax.rsqrt(var + jnp.float32(eps))
         * ln_g_ref[...] + ln_b_ref[...])

    # MLP: Linear -> exact (erf) GELU -> Linear; residual add.  The [:, 0, :]
    # squeeze of the reference module is implicit (probe length is 1).
    h1 = (jnp.dot(y.astype(w1_ref.dtype), w1_ref[...],
                  preferred_element_type=jnp.float32) + b1_ref[...])
    h1 = 0.5 * h1 * (1.0 + jax.lax.erf(h1 * jnp.float32(0.7071067811865476)))
    h2 = (jnp.dot(h1.astype(w2_ref.dtype), w2_ref[...],
                  preferred_element_type=jnp.float32) + b2_ref[...])

    out_ref[...] = (attn_out + h2).astype(out_ref.dtype)


def _const_spec(arr):
    """Constant-index (weight/bias) BlockSpec, single-buffered when supported."""
    index_map = lambda b: (0,) * arr.ndim
    if hasattr(pl, "Buffered"):
        try:
            return pl.BlockSpec(arr.shape, index_map, pipeline_mode=pl.Buffered(1))
        except TypeError:
            pass
    return pl.BlockSpec(arr.shape, index_map)


def map_head_forward(x, params, *, num_heads, eps=1e-5, block_b=None):
    B, S, D = x.shape
    assert D % num_heads == 0, "llm_dim must be divisible by num_heads"
    dh = D // num_heads
    mlp_dim = params["w1"].shape[0]
    out_dtype = x.dtype
    f32 = jnp.float32

    # ---- one-time host-side algebraic prep (outside the kernel) -------------
    # Probe query projection is batch independent; fold bq and the 1/sqrt(dh)
    # scale, then fold the ENTIRE K projection + per-head query dot into a
    # single (D, H) matrix:  scores = ((x @ Wk.T + bk) * q) @ seg_dh
    #                                =  x @ W_score + b_score
    scale = 1.0 / np.sqrt(dh)
    q = ((params["probe"].astype(f32) @ params["wq"].astype(f32).T
          + params["bq"].astype(f32)) * f32(scale))                         # (1, D)
    head_id = jnp.arange(D, dtype=jnp.int32) // dh
    seg_dh = (head_id[:, None]
              == jnp.arange(num_heads, dtype=jnp.int32)[None, :]).astype(f32)  # (D, H)
    seg_hd = seg_dh.T                                                            # (H, D)

    w_score = ((params["wk"].astype(f32).T * q) @ seg_dh).astype(params["wk"].dtype)  # (D, H)
    b_score = (params["bk"].astype(f32) * q) @ seg_dh                                  # (1, H)

    # Pre-transpose remaining weights to (in_features, out_features).
    wv_t, wo_t = params["wv"].T, params["wo"].T
    w1_t, w2_t = params["w1"].T, params["w2"].T
    seg_hd = seg_hd.astype(wv_t.dtype)

    # ---- padding / batch tiling ---------------------------------------------
    itemsize = jnp.dtype(x.dtype).itemsize
    pack = {4: 8, 2: 16, 1: 32}.get(itemsize, 8)     # sublane pack for x's dtype
    S_pad = -(-S // pack) * pack                     # S multiple of pack => reshape is free
    if block_b is None:
        block_b = max(pack, min(32, -(-B // pack) * pack))
    Bt = int(block_b)
    assert Bt % pack == 0, "block_b must be a multiple of the sublane pack"
    B_pad = -(-B // Bt) * Bt
    if B_pad != B or S_pad != S:
        # Padded batch rows produce finite values and are sliced away; padded
        # sequence positions are masked to -inf inside the kernel.
        x = jnp.pad(x, ((0, B_pad - B), (0, S_pad - S), (0, 0)))
    grid = (B_pad // Bt,)   # NOTE: keep >= 2 (ideally even) steps on v7x for TC balance

    consts = (w_score, b_score, seg_hd,
              wv_t, params["bv"], wo_t, params["bo"],
              params["ln_g"], params["ln_b"],
              w1_t, params["b1"], w2_t, params["b2"])
    in_specs = ([pl.BlockSpec((Bt, S_pad, D), lambda b: (b, 0, 0))]
                + [_const_spec(a) for a in consts])
    out_spec = pl.BlockSpec((Bt, D), lambda b: (b, 0))

    # ---- cost estimate (post K-fold / bias-fold) -----------------------------
    flops = int(B_pad * (S_pad * (2 * D * num_heads      # folded score matmul
                                  + 2 * D * D            # V projection
                                  + 2 * num_heads * D    # prob -> lane expansion
                                  + 2 * D)               # weighted sum
                         + 2 * D * D                     # attention out-proj
                         + 4 * D * mlp_dim))             # MLP
    transcendentals = int(B_pad * (S_pad * num_heads + num_heads + 1 + mlp_dim))
    const_bytes = sum(int(np.prod(a.shape)) * jnp.dtype(a.dtype).itemsize for a in consts)
    bytes_accessed = int(B_pad * S_pad * D * itemsize + const_bytes
                         + B_pad * D * jnp.dtype(out_dtype).itemsize)

    # ---- VMEM budget: actual need with headroom, capped below physical -------
    x_tile = Bt * S_pad * D * itemsize
    out_tile = Bt * D * jnp.dtype(out_dtype).itemsize
    f32_intermediates = 4 * Bt * S_pad * D * 4
    vmem_need = 2 * x_tile + const_bytes + 2 * out_tile + f32_intermediates
    try:
        vmem_cap = int(pltpu.get_tpu_info().vmem_capacity_bytes)
    except Exception:
        vmem_cap = 64 * 1024 * 1024                  # conservative (v7x per-TC)
    vmem_limit = int(min(max(2 * vmem_need, 32 * 1024 * 1024), int(0.8 * vmem_cap)))
    vmem_limit = int(max(vmem_limit, vmem_need + (4 << 20)))

    kernel = functools.partial(map_head_kernel, eps=eps, seq_len=S)
    out = pl.pallas_call(
        kernel,
        out_shape=jax.ShapeDtypeStruct((B_pad, D), out_dtype),
        grid=grid,
        in_specs=in_specs,
        out_specs=out_spec,
        compiler_params=pltpu.CompilerParams(
            dimension_semantics=("parallel",),       # megacore-shard the batch axis
            vmem_limit_bytes=vmem_limit,
        ),
        cost_estimate=pl.CostEstimate(flops=flops,
                                      transcendentals=transcendentals,
                                      bytes_accessed=bytes_accessed),
    )(x, *consts)
    return out[:B]


def init_params(key, llm_dim, mlp_dim):
    ks = jax.random.split(key, 16)
    n = lambda k, shape, s: (jax.random.normal(k, shape, jnp.float32) * s)
    return {
        "probe": n(ks[0], (1, llm_dim), 0.02),
        "wq": n(ks[1], (llm_dim, llm_dim), 0.05),
        "bq": n(ks[2], (1, llm_dim), 0.01),
        "wk": n(ks[3], (llm_dim, llm_dim), 0.05),
        "bk": n(ks[4], (1, llm_dim), 0.01),
        "wv": n(ks[5], (llm_dim, llm_dim), 0.05),
        "bv": n(ks[6], (1, llm_dim), 0.01),
        "wo": n(ks[7], (llm_dim, llm_dim), 0.05),
        "bo": n(ks[8], (1, llm_dim), 0.01),
        "ln_g": 1.0 + n(ks[9], (1, llm_dim), 0.01),
        "ln_b": n(ks[10], (1, llm_dim), 0.01),
        "w1": n(ks[11], (mlp_dim, llm_dim), 0.05),
        "b1": n(ks[12], (1, mlp_dim), 0.01),
        "w2": n(ks[13], (llm_dim, mlp_dim), 0.05),
        "b2": n(ks[14], (1, llm_dim), 0.01),
    }


def map_head_reference(x, p, *, num_heads, eps=1e-5):
    """Plain-JAX reference mirroring torch.nn.MultiheadAttention semantics."""
    B, S, D = x.shape
    dh = D // num_heads
    probe = jnp.broadcast_to(p["probe"][None, :, :], (B, 1, D))
    q = probe @ p["wq"].T + p["bq"]
    k = x @ p["wk"].T + p["bk"]
    v = x @ p["wv"].T + p["bv"]
    qh = q.reshape(B, 1, num_heads, dh).transpose(0, 2, 1, 3)
    kh = k.reshape(B, S, num_heads, dh).transpose(0, 2, 1, 3)
    vh = v.reshape(B, S, num_heads, dh).transpose(0, 2, 1, 3)
    s = (qh @ kh.transpose(0, 1, 3, 2)) / np.sqrt(dh)
    a = jax.nn.softmax(s, axis=-1)
    o = (a @ vh).transpose(0, 2, 1, 3).reshape(B, 1, D)
    attn_out = o @ p["wo"].T + p["bo"]
    mean = attn_out.mean(-1, keepdims=True)
    var = ((attn_out - mean) ** 2).mean(-1, keepdims=True)
    y = (attn_out - mean) / jnp.sqrt(var + eps) * p["ln_g"] + p["ln_b"]
    h1 = y @ p["w1"].T + p["b1"]
    h1 = 0.5 * h1 * (1.0 + jax.lax.erf(h1 / np.sqrt(2.0)))
    h2 = h1 @ p["w2"].T + p["b2"]
    return (attn_out + h2)[:, 0, :]


if __name__ == "__main__":
    B, S, D, H = 2, 8, 32, 4
    MLP_DIM = 4 * D  # matches MLPBlock default (mlp_dim=None -> 4*llm_dim)

    key = jax.random.PRNGKey(0)
    kx, kp = jax.random.split(key)
    x = jax.random.normal(kx, (B, S, D), jnp.float32)
    params = init_params(kp, D, MLP_DIM)

    out = map_head_forward(x, params, num_heads=H)
    out = jax.block_until_ready(out)

    ref = map_head_reference(x, params, num_heads=H)
    assert out.shape == (B, D)
    np.testing.assert_allclose(np.asarray(out), np.asarray(ref), rtol=3e-3, atol=3e-3)

    print("KERNEL_OK")
</pallas_src>

<mosaic_0001>
module attributes {stable_mosaic.version = 11 : i64} {
  func.func @map_head_kernel(%arg0: i32, %arg1: memref<8x8x32xf32, #tpu.memory_space<vmem>>, %arg2: memref<32x4xf32, #tpu.memory_space<vmem>>, %arg3: memref<1x4xf32, #tpu.memory_space<vmem>>, %arg4: memref<4x32xf32, #tpu.memory_space<vmem>>, %arg5: memref<32x32xf32, #tpu.memory_space<vmem>>, %arg6: memref<1x32xf32, #tpu.memory_space<vmem>>, %arg7: memref<32x32xf32, #tpu.memory_space<vmem>>, %arg8: memref<1x32xf32, #tpu.memory_space<vmem>>, %arg9: memref<1x32xf32, #tpu.memory_space<vmem>>, %arg10: memref<1x32xf32, #tpu.memory_space<vmem>>, %arg11: memref<32x128xf32, #tpu.memory_space<vmem>>, %arg12: memref<1x128xf32, #tpu.memory_space<vmem>>, %arg13: memref<128x32xf32, #tpu.memory_space<vmem>>, %arg14: memref<1x32xf32, #tpu.memory_space<vmem>>, %arg15: memref<8x32xf32, #tpu.memory_space<vmem>>) attributes {dimension_semantics = [#tpu.dimension_semantics<parallel>], iteration_bounds = array<i64: 1>, scalar_prefetch = 0 : i64, scratch_operands = 0 : i64, tpu.core_type = #tpu.core_type<tc>, window_params = [{transform_indices = @transform_0, window_bounds = array<i64: 8, 8, 32>}, {pipeline_mode = #tpu.pipeline_mode<synchronous>, transform_indices = @transform_1, window_bounds = array<i64: 32, 4>}, {pipeline_mode = #tpu.pipeline_mode<synchronous>, transform_indices = @transform_2, window_bounds = array<i64: 1, 4>}, {pipeline_mode = #tpu.pipeline_mode<synchronous>, transform_indices = @transform_3, window_bounds = array<i64: 4, 32>}, {pipeline_mode = #tpu.pipeline_mode<synchronous>, transform_indices = @transform_4, window_bounds = array<i64: 32, 32>}, {pipeline_mode = #tpu.pipeline_mode<synchronous>, transform_indices = @transform_5, window_bounds = array<i64: 1, 32>}, {pipeline_mode = #tpu.pipeline_mode<synchronous>, transform_indices = @transform_6, window_bounds = array<i64: 32, 32>}, {pipeline_mode = #tpu.pipeline_mode<synchronous>, transform_indices = @transform_7, window_bounds = array<i64: 1, 32>}, {pipeline_mode = #tpu.pipeline_mode<synchronous>, transform_indices = @transform_8, window_bounds = array<i64: 1, 32>}, {pipeline_mode = #tpu.pipeline_mode<synchronous>, transform_indices = @transform_9, window_bounds = array<i64: 1, 32>}, {pipeline_mode = #tpu.pipeline_mode<synchronous>, transform_indices = @transform_10, window_bounds = array<i64: 32, 128>}, {pipeline_mode = #tpu.pipeline_mode<synchronous>, transform_indices = @transform_11, window_bounds = array<i64: 1, 128>}, {pipeline_mode = #tpu.pipeline_mode<synchronous>, transform_indices = @transform_12, window_bounds = array<i64: 128, 32>}, {pipeline_mode = #tpu.pipeline_mode<synchronous>, transform_indices = @transform_13, window_bounds = array<i64: 1, 32>}, {transform_indices = @transform_14, window_bounds = array<i64: 8, 32>}]} {
    %c0 = arith.constant 0 : index
    %c0_0 = arith.constant 0 : index
    %c0_1 = arith.constant 0 : index
    %0 = vector.load %arg1[%c0, %c0_0, %c0_1] : memref<8x8x32xf32, #tpu.memory_space<vmem>>, vector<8x8x32xf32>
    %1 = vector.shape_cast %0 : vector<8x8x32xf32> to vector<64x32xf32>
    %c0_2 = arith.constant 0 : index
    %c0_3 = arith.constant 0 : index
    %2 = vector.load %arg2[%c0_2, %c0_3] : memref<32x4xf32, #tpu.memory_space<vmem>>, vector<32x4xf32>
    %cst = arith.constant dense<0.000000e+00> : vector<64x4xf32>
    %3 = tpu.matmul %1, %2, %cst {dimension_numbers = #tpu.dot_dimension_numbers<[1], [0], [0], [1], [0, 0, 1, 1], [], []>} : vector<64x32xf32>, vector<32x4xf32>, vector<64x4xf32> -> vector<64x4xf32>
    %c0_4 = arith.constant 0 : index
    %c0_5 = arith.constant 0 : index
    %4 = vector.load %arg3[%c0_4, %c0_5] : memref<1x4xf32, #tpu.memory_space<vmem>>, vector<1x4xf32>
    %5 = vector.broadcast %4 : vector<1x4xf32> to vector<64x4xf32>
    %6 = arith.addf %3, %5 : vector<64x4xf32>
    %7 = vector.shape_cast %6 : vector<64x4xf32> to vector<8x8x4xf32>
    %cst_6 = arith.constant dense<0xFF800000> : vector<8x4xf32>
    %8 = vector.multi_reduction <maximumf>, %7, %cst_6 [1] : vector<8x8x4xf32> to vector<8x4xf32>
    %9 = vector.shape_cast %8 : vector<8x4xf32> to vector<8x1x4xf32>
    %10 = vector.broadcast %9 : vector<8x1x4xf32> to vector<8x8x4xf32>
    %11 = arith.subf %7, %10 : vector<8x8x4xf32>
    %12 = math.exp %11 : vector<8x8x4xf32>
    %cst_7 = arith.constant dense<0.000000e+00> : vector<8x4xf32>
    %13 = vector.multi_reduction <add>, %12, %cst_7 [1] : vector<8x8x4xf32> to vector<8x4xf32>
    %14 = vector.shape_cast %13 : vector<8x4xf32> to vector<8x1x4xf32>
    %15 = tpu.reciprocal %14 {approx = true} : vector<8x1x4xf32> -> vector<8x1x4xf32>
    %16 = vector.broadcast %15 : vector<8x1x4xf32> to vector<8x8x4xf32>
    %17 = arith.mulf %12, %16 : vector<8x8x4xf32>
    %c0_8 = arith.constant 0 : index
    %c0_9 = arith.constant 0 : index
    %18 = vector.load %arg5[%c0_8, %c0_9] : memref<32x32xf32, #tpu.memory_space<vmem>>, vector<32x32xf32>
    %cst_10 = arith.constant dense<0.000000e+00> : vector<64x32xf32>
    %19 = tpu.matmul %1, %18, %cst_10 {dimension_numbers = #tpu.dot_dimension_numbers<[1], [0], [0], [1], [0, 0, 1, 1], [], []>} : vector<64x32xf32>, vector<32x32xf32>, vector<64x32xf32> -> vector<64x32xf32>
    %20 = vector.shape_cast %17 : vector<8x8x4xf32> to vector<64x4xf32>
    %c0_11 = arith.constant 0 : index
    %c0_12 = arith.constant 0 : index
    %21 = vector.load %arg4[%c0_11, %c0_12] : memref<4x32xf32, #tpu.memory_space<vmem>>, vector<4x32xf32>
    %cst_13 = arith.constant dense<0.000000e+00> : vector<64x32xf32>
    %22 = tpu.matmul %20, %21, %cst_13 {dimension_numbers = #tpu.dot_dimension_numbers<[1], [0], [0], [1], [0, 0, 1, 1], [], []>} : vector<64x4xf32>, vector<4x32xf32>, vector<64x32xf32> -> vector<64x32xf32>
    %23 = arith.mulf %22, %19 : vector<64x32xf32>
    %24 = vector.shape_cast %23 : vector<64x32xf32> to vector<8x8x32xf32>
    %cst_14 = arith.constant dense<0.000000e+00> : vector<8x32xf32>
    %25 = vector.multi_reduction <add>, %24, %cst_14 [1] : vector<8x8x32xf32> to vector<8x32xf32>
    %c0_15 = arith.constant 0 : index
    %c0_16 = arith.constant 0 : index
    %26 = vector.load %arg6[%c0_15, %c0_16] : memref<1x32xf32, #tpu.memory_space<vmem>>, vector<1x32xf32>
    %27 = vector.broadcast %26 : vector<1x32xf32> to vector<8x32xf32>
    %28 = arith.addf %25, %27 : vector<8x32xf32>
    %c0_17 = arith.constant 0 : index
    %c0_18 = arith.constant 0 : index
    %29 = vector.load %arg7[%c0_17, %c0_18] : memref<32x32xf32, #tpu.memory_space<vmem>>, vector<32x32xf32>
    %cst_19 = arith.constant dense<0.000000e+00> : vector<8x32xf32>
    %30 = tpu.matmul %28, %29, %cst_19 {dimension_numbers = #tpu.dot_dimension_numbers<[1], [0], [0], [1], [0, 0, 1, 1], [], []>} : vector<8x32xf32>, vector<32x32xf32>, vector<8x32xf32> -> vector<8x32xf32>
    %c0_20 = arith.constant 0 : index
    %c0_21 = arith.constant 0 : index
    %31 = vector.load %arg8[%c0_20, %c0_21] : memref<1x32xf32, #tpu.memory_space<vmem>>, vector<1x32xf32>
    %32 = vector.broadcast %31 : vector<1x32xf32> to vector<8x32xf32>
    %33 = arith.addf %30, %32 : vector<8x32xf32>
    %cst_22 = arith.constant dense<0.000000e+00> : vector<8xf32>
    %34 = vector.multi_reduction <add>, %33, %cst_22 [1] : vector<8x32xf32> to vector<8xf32>
    %35 = vector.shape_cast %34 : vector<8xf32> to vector<8x1xf32>
    %cst_23 = arith.constant 3.200000e+01 : f32
    %36 = vector.broadcast %cst_23 : f32 to vector<8x1xf32>
    %37 = arith.divf %35, %36 : vector<8x1xf32>
    %38 = vector.broadcast %37 : vector<8x1xf32> to vector<8x32xf32>
    %39 = arith.subf %33, %38 : vector<8x32xf32>
    %40 = arith.mulf %39, %39 : vector<8x32xf32>
    %cst_24 = arith.constant dense<0.000000e+00> : vector<8xf32>
    %41 = vector.multi_reduction <add>, %40, %cst_24 [1] : vector<8x32xf32> to vector<8xf32>
    %42 = vector.shape_cast %41 : vector<8xf32> to vector<8x1xf32>
    %cst_25 = arith.constant 3.200000e+01 : f32
    %43 = vector.broadcast %cst_25 : f32 to vector<8x1xf32>
    %44 = arith.divf %42, %43 : vector<8x1xf32>
    %45 = vector.broadcast %37 : vector<8x1xf32> to vector<8x32xf32>
    %46 = arith.subf %33, %45 : vector<8x32xf32>
    %cst_26 = arith.constant 9.99999974E-6 : f32
    %47 = vector.broadcast %cst_26 : f32 to vector<8x1xf32>
    %48 = arith.addf %44, %47 : vector<8x1xf32>
    %49 = math.rsqrt %48 : vector<8x1xf32>
    %50 = vector.broadcast %49 : vector<8x1xf32> to vector<8x32xf32>
    %51 = arith.mulf %46, %50 : vector<8x32xf32>
    %c0_27 = arith.constant 0 : index
    %c0_28 = arith.constant 0 : index
    %52 = vector.load %arg9[%c0_27, %c0_28] : memref<1x32xf32, #tpu.memory_space<vmem>>, vector<1x32xf32>
    %53 = vector.broadcast %52 : vector<1x32xf32> to vector<8x32xf32>
    %54 = arith.mulf %51, %53 : vector<8x32xf32>
    %c0_29 = arith.constant 0 : index
    %c0_30 = arith.constant 0 : index
    %55 = vector.load %arg10[%c0_29, %c0_30] : memref<1x32xf32, #tpu.memory_space<vmem>>, vector<1x32xf32>
    %56 = vector.broadcast %55 : vector<1x32xf32> to vector<8x32xf32>
    %57 = arith.addf %54, %56 : vector<8x32xf32>
    %c0_31 = arith.constant 0 : index
    %c0_32 = arith.constant 0 : index
    %58 = vector.load %arg11[%c0_31, %c0_32] : memref<32x128xf32, #tpu.memory_space<vmem>>, vector<32x128xf32>
    %cst_33 = arith.constant dense<0.000000e+00> : vector<8x128xf32>
    %59 = tpu.matmul %57, %58, %cst_33 {dimension_numbers = #tpu.dot_dimension_numbers<[1], [0], [0], [1], [0, 0, 1, 1], [], []>} : vector<8x32xf32>, vector<32x128xf32>, vector<8x128xf32> -> vector<8x128xf32>
    %c0_34 = arith.constant 0 : index
    %c0_35 = arith.constant 0 : index
    %60 = vector.load %arg12[%c0_34, %c0_35] : memref<1x128xf32, #tpu.memory_space<vmem>>, vector<1x128xf32>
    %61 = vector.broadcast %60 : vector<1x128xf32> to vector<8x128xf32>
    %62 = arith.addf %59, %61 : vector<8x128xf32>
    %cst_36 = arith.constant 5.000000e-01 : f32
    %63 = vector.broadcast %cst_36 : f32 to vector<8x128xf32>
    %64 = arith.mulf %63, %62 : vector<8x128xf32>
    %cst_37 = arith.constant 0.707106769 : f32
    %65 = vector.broadcast %cst_37 : f32 to vector<8x128xf32>
    %66 = arith.mulf %62, %65 : vector<8x128xf32>
    %67 = math.erf %66 : vector<8x128xf32>
    %cst_38 = arith.constant 1.000000e+00 : f32
    %68 = vector.broadcast %cst_38 : f32 to vector<8x128xf32>
    %69 = arith.addf %68, %67 : vector<8x128xf32>
    %70 = arith.mulf %64, %69 : vector<8x128xf32>
    %c0_39 = arith.constant 0 : index
    %c0_40 = arith.constant 0 : index
    %71 = vector.load %arg13[%c0_39, %c0_40] : memref<128x32xf32, #tpu.memory_space<vmem>>, vector<128x32xf32>
    %cst_41 = arith.constant dense<0.000000e+00> : vector<8x32xf32>
    %72 = tpu.matmul %70, %71, %cst_41 {dimension_numbers = #tpu.dot_dimension_numbers<[1], [0], [0], [1], [0, 0, 1, 1], [], []>} : vector<8x128xf32>, vector<128x32xf32>, vector<8x32xf32> -> vector<8x32xf32>
    %c0_42 = arith.constant 0 : index
    %c0_43 = arith.constant 0 : index
    %73 = vector.load %arg14[%c0_42, %c0_43] : memref<1x32xf32, #tpu.memory_space<vmem>>, vector<1x32xf32>
    %74 = vector.broadcast %73 : vector<1x32xf32> to vector<8x32xf32>
    %75 = arith.addf %72, %74 : vector<8x32xf32>
    %76 = arith.addf %33, %75 : vector<8x32xf32>
    %c0_44 = arith.constant 0 : index
    %c0_45 = arith.constant 0 : index
    %77 = vector.load %arg15[%c0_44, %c0_45] : memref<8x32xf32, #tpu.memory_space<vmem>>, vector<8x32xf32>
    tpu.vector_store %arg15[%c0_44, %c0_45], %76 {strides = array<i32>} : memref<8x32xf32, #tpu.memory_space<vmem>>, vector<8x32xf32>,
    return
  }
  func.func @transform_0(%arg0: i32) -> (i32, i32, i32) {
    %c0_i32 = arith.constant 0 : i32
    %c0_i32_0 = arith.constant 0 : i32
    %c0_i32_1 = arith.constant 0 : i32
    return %arg0, %c0_i32, %c0_i32_0 : i32, i32, i32
  }
  func.func @transform_1(%arg0: i32) -> (i32, i32) {
    %c0_i32 = arith.constant 0 : i32
    %c0_i32_0 = arith.constant 0 : i32
    %c0_i32_1 = arith.constant 0 : i32
    return %c0_i32, %c0_i32_0 : i32, i32
  }
  func.func @transform_2(%arg0: i32) -> (i32, i32) {
    %c0_i32 = arith.constant 0 : i32
    %c0_i32_0 = arith.constant 0 : i32
    %c0_i32_1 = arith.constant 0 : i32
    return %c0_i32, %c0_i32_0 : i32, i32
  }
  func.func @transform_3(%arg0: i32) -> (i32, i32) {
    %c0_i32 = arith.constant 0 : i32
    %c0_i32_0 = arith.constant 0 : i32
    %c0_i32_1 = arith.constant 0 : i32
    return %c0_i32, %c0_i32_0 : i32, i32
  }
  func.func @transform_4(%arg0: i32) -> (i32, i32) {
    %c0_i32 = arith.constant 0 : i32
    %c0_i32_0 = arith.constant 0 : i32
    %c0_i32_1 = arith.constant 0 : i32
    return %c0_i32, %c0_i32_0 : i32, i32
  }
  func.func @transform_5(%arg0: i32) -> (i32, i32) {
    %c0_i32 = arith.constant 0 : i32
    %c0_i32_0 = arith.constant 0 : i32
    %c0_i32_1 = arith.constant 0 : i32
    return %c0_i32, %c0_i32_0 : i32, i32
  }
  func.func @transform_6(%arg0: i32) -> (i32, i32) {
    %c0_i32 = arith.constant 0 : i32
    %c0_i32_0 = arith.constant 0 : i32
    %c0_i32_1 = arith.constant 0 : i32
    return %c0_i32, %c0_i32_0 : i32, i32
  }
  func.func @transform_7(%arg0: i32) -> (i32, i32) {
    %c0_i32 = arith.constant 0 : i32
    %c0_i32_0 = arith.constant 0 : i32
    %c0_i32_1 = arith.constant 0 : i32
    return %c0_i32, %c0_i32_0 : i32, i32
  }
  func.func @transform_8(%arg0: i32) -> (i32, i32) {
    %c0_i32 = arith.constant 0 : i32
    %c0_i32_0 = arith.constant 0 : i32
    %c0_i32_1 = arith.constant 0 : i32
    return %c0_i32, %c0_i32_0 : i32, i32
  }
  func.func @transform_9(%arg0: i32) -> (i32, i32) {
    %c0_i32 = arith.constant 0 : i32
    %c0_i32_0 = arith.constant 0 : i32
    %c0_i32_1 = arith.constant 0 : i32
    return %c0_i32, %c0_i32_0 : i32, i32
  }
  func.func @transform_10(%arg0: i32) -> (i32, i32) {
    %c0_i32 = arith.constant 0 : i32
    %c0_i32_0 = arith.constant 0 : i32
    %c0_i32_1 = arith.constant 0 : i32
    return %c0_i32, %c0_i32_0 : i32, i32
  }
  func.func @transform_11(%arg0: i32) -> (i32, i32) {
    %c0_i32 = arith.constant 0 : i32
    %c0_i32_0 = arith.constant 0 : i32
    %c0_i32_1 = arith.constant 0 : i32
    return %c0_i32, %c0_i32_0 : i32, i32
  }
  func.func @transform_12(%arg0: i32) -> (i32, i32) {
    %c0_i32 = arith.constant 0 : i32
    %c0_i32_0 = arith.constant 0 : i32
    %c0_i32_1 = arith.constant 0 : i32
    return %c0_i32, %c0_i32_0 : i32, i32
  }
  func.func @transform_13(%arg0: i32) -> (i32, i32) {
    %c0_i32 = arith.constant 0 : i32
    %c0_i32_0 = arith.constant 0 : i32
    %c0_i32_1 = arith.constant 0 : i32
    return %c0_i32, %c0_i32_0 : i32, i32
  }
  func.func @transform_14(%arg0: i32) -> (i32, i32) {
    %c0_i32 = arith.constant 0 : i32
    %c0_i32_0 = arith.constant 0 : i32
    return %arg0, %c0_i32 : i32, i32
  }
}

</mosaic_0001>

<llo_original>
// kernel: tpu_custom_call.1
$region0: #{tpu_custom_call.1}
  #allocation0 [shape = 'u32[]', space=smem, size = 0x4, offset = 0x4, fixed_abs, tag = 'smem constant byte address 0x4 - core index']
  #allocation1 [shape = 'u32[144,128]{1,0:T(1,128)}', space=vmem, size = 0x12000, scoped, tag = 'internal scratch']
  %s0 = inlined_call_operand.vmem [shape: f32[8,8,32], index: 0, kind: input, shape index: {}]
  %s1 = inlined_call_operand.vmem [shape: f32[32,4], index: 1, kind: input, shape index: {}]
  %s2 = inlined_call_operand.vmem [shape: f32[1,4], index: 2, kind: input, shape index: {}]
  %s3 = inlined_call_operand.vmem [shape: f32[4,32], index: 3, kind: input, shape index: {}]
  %s4 = inlined_call_operand.vmem [shape: f32[32,32], index: 4, kind: input, shape index: {}]
  %s5 = inlined_call_operand.vmem [shape: f32[1,32], index: 5, kind: input, shape index: {}]
  %s6 = inlined_call_operand.vmem [shape: f32[32,32], index: 6, kind: input, shape index: {}]
  %s7 = inlined_call_operand.vmem [shape: f32[1,32], index: 7, kind: input, shape index: {}]
  %s8 = inlined_call_operand.vmem [shape: f32[1,32], index: 8, kind: input, shape index: {}]
  %s9 = inlined_call_operand.vmem [shape: f32[1,32], index: 9, kind: input, shape index: {}]
  %s10 = inlined_call_operand.vmem [shape: f32[32,128], index: 10, kind: input, shape index: {}]
  %s11 = inlined_call_operand.vmem [shape: f32[1,128], index: 11, kind: input, shape index: {}]
  %s12 = inlined_call_operand.vmem [shape: f32[128,32], index: 12, kind: input, shape index: {}]
  %s13 = inlined_call_operand.vmem [shape: f32[1,32], index: 13, kind: input, shape index: {}]
  %s14 = inlined_call_operand.hbm [shape: f32[8,32], index: 14, kind: output, shape index: {}]
  %s15 = sld [smem:[#allocation0]]
  $region66: #{tpu_custom_call.1} parent=0
    _
  %s17 = ssub.s32 1, %s15
  %s18 = scalar_select 0, %s17, %s15
  $region1: #{tpu_custom_call.1} parent=0
    #allocation2 [shape = 'u8[4096]{0}', space=vmem, size = 0x1000, scoped, tag = 'output window, operand 0, single buffered']
    #allocation3 [shape = 's32[1]{0}', space=sflag, size = 0x4, scoped, tag = 'scoped memory for tpu_custom_call.1']
    %19 = vsyncpa [#allocation3], 0
    // Predicated region
    $region2: #{tpu_custom_call.1} parent=1 // pred_check
      _
    $region3: #{tpu_custom_call.1} parent=1 // pred_check_branch
      %21 = sbr.rel (0) target = $region5
    $region4: #{tpu_custom_call.1} parent=1 // pred_region
      _
    $region5: #{tpu_custom_call.1} parent=1 // pred_fallthru
      _
    // Predicated region
    $region6: #{tpu_custom_call.1} parent=1 // pred_check
      _
    $region7: #{tpu_custom_call.1} parent=1 // pred_check_branch
      %23 = sbr.rel (0) target = $region9
    $region8: #{tpu_custom_call.1} parent=1 // pred_region
      _
    $region9: #{tpu_custom_call.1} parent=1 // pred_fallthru
      _
    // Predicated region
    $region10: #{tpu_custom_call.1} parent=1 // pred_check
      _
    $region11: #{tpu_custom_call.1} parent=1 // pred_check_branch
      %25 = sbr.rel (0) target = $region13
    $region12: #{tpu_custom_call.1} parent=1 // pred_region
      _
    $region13: #{tpu_custom_call.1} parent=1 // pred_fallthru
      _
    // Predicated region
    $region14: #{tpu_custom_call.1} parent=1 // pred_check
      _
    $region15: #{tpu_custom_call.1} parent=1 // pred_check_branch
      %27 = sbr.rel (0) target = $region17
    $region16: #{tpu_custom_call.1} parent=1 // pred_region
      _
    $region17: #{tpu_custom_call.1} parent=1 // pred_fallthru
      _
    // Predicated region
    $region18: #{tpu_custom_call.1} parent=1 // pred_check
      _
    $region19: #{tpu_custom_call.1} parent=1 // pred_check_branch
      %29 = sbr.rel (0) target = $region21
    $region20: #{tpu_custom_call.1} parent=1 // pred_region
      _
    $region21: #{tpu_custom_call.1} parent=1 // pred_fallthru
      _
    // Predicated region
    $region22: #{tpu_custom_call.1} parent=1 // pred_check
      _
    $region23: #{tpu_custom_call.1} parent=1 // pred_check_branch
      %31 = sbr.rel (0) target = $region25
    $region24: #{tpu_custom_call.1} parent=1 // pred_region
      _
    $region25: #{tpu_custom_call.1} parent=1 // pred_fallthru
      _
    // Predicated region
    $region26: #{tpu_custom_call.1} parent=1 // pred_check
      _
    $region27: #{tpu_custom_call.1} parent=1 // pred_check_branch
      %33 = sbr.rel (0) target = $region29
    $region28: #{tpu_custom_call.1} parent=1 // pred_region
      _
    $region29: #{tpu_custom_call.1} parent=1 // pred_fallthru
      _
    // Predicated region
    $region30: #{tpu_custom_call.1} parent=1 // pred_check
      _
    $region31: #{tpu_custom_call.1} parent=1 // pred_check_branch
      %35 = sbr.rel (0) target = $region33
    $region32: #{tpu_custom_call.1} parent=1 // pred_region
      _
    $region33: #{tpu_custom_call.1} parent=1 // pred_fallthru
      _
    // Predicated region
    $region34: #{tpu_custom_call.1} parent=1 // pred_check
      _
    $region35: #{tpu_custom_call.1} parent=1 // pred_check_branch
      %37 = sbr.rel (0) target = $region37
    $region36: #{tpu_custom_call.1} parent=1 // pred_region
      _
    $region37: #{tpu_custom_call.1} parent=1 // pred_fallthru
      _
    // Predicated region
    $region38: #{tpu_custom_call.1} parent=1 // pred_check
      _
    $region39: #{tpu_custom_call.1} parent=1 // pred_check_branch
      %39 = sbr.rel (0) target = $region41
    $region40: #{tpu_custom_call.1} parent=1 // pred_region
      _
    $region41: #{tpu_custom_call.1} parent=1 // pred_fallthru
      _
    // Predicated region
    $region42: #{tpu_custom_call.1} parent=1 // pred_check
      _
    $region43: #{tpu_custom_call.1} parent=1 // pred_check_branch
      %41 = sbr.rel (0) target = $region45
    $region44: #{tpu_custom_call.1} parent=1 // pred_region
      _
    $region45: #{tpu_custom_call.1} parent=1 // pred_fallthru
      _
    // Predicated region
    $region46: #{tpu_custom_call.1} parent=1 // pred_check
      _
    $region47: #{tpu_custom_call.1} parent=1 // pred_check_branch
      %43 = sbr.rel (0) target = $region49
    $region48: #{tpu_custom_call.1} parent=1 // pred_region
      _
    $region49: #{tpu_custom_call.1} parent=1 // pred_fallthru
      _
    // Predicated region
    $region50: #{tpu_custom_call.1} parent=1 // pred_check
      _
    $region51: #{tpu_custom_call.1} parent=1 // pred_check_branch
      %45 = sbr.rel (0) target = $region53
    $region52: #{tpu_custom_call.1} parent=1 // pred_region
      _
    $region53: #{tpu_custom_call.1} parent=1 // pred_fallthru
      _
    // Predicated region
    $region54: #{tpu_custom_call.1} parent=1 // pred_check
      _
    $region55: #{tpu_custom_call.1} parent=1 // pred_check_branch
      %47 = sbr.rel (0) target = $region57
    $region56: #{tpu_custom_call.1} parent=1 // pred_region
      _
    $region57: #{tpu_custom_call.1} parent=1 // pred_fallthru
      _
    %v48 = vld [vmem:[%s0] sm:$0xff]
    %v49 = vld [vmem:[%s0 + $0x8] sm:$0xff]
    %v50 = vld [vmem:[%s0 + $0x10] sm:$0xff]
    %v51 = vld [vmem:[%s0 + $0x18] sm:$0xff]
    %v52 = vld [vmem:[%s0 + $0x20] sm:$0xff]
    %v53 = vld [vmem:[%s0 + $0x28] sm:$0xff]
    %v54 = vld [vmem:[%s0 + $0x30] sm:$0xff]
    %v55 = vld [vmem:[%s0 + $0x38] sm:$0xff]
    %v56 = vld [vmem:[%s1] sm:$0xff]
    %v57 = vld [vmem:[%s1 + $0x8] sm:$0xff]
    %v58 = vld [vmem:[%s1 + $0x10] sm:$0xff]
    %v59 = vld [vmem:[%s1 + $0x18] sm:$0xff]
    %v60 = vld [vmem:[%s2] sm:$0x1]
    %v62 = vlaneseq
    %v63 = vshrl.u32 %v62, 7
    %v64 = vsub.s32 0, %v63
    %v65 = vrot.slane %v60, %v64
    %vm67 = vcmask 261120
    %v69 = vsel %vm67, %v48, 0
    %v72 = vsel %vm67, %v49, 0
    %v75 = vsel %vm67, %v50, 0
    %v78 = vsel %vm67, %v51, 0
    %v81 = vsel %vm67, %v52, 0
    %v84 = vsel %vm67, %v53, 0
    %v87 = vsel %vm67, %v54, 0
    %v90 = vsel %vm67, %v55, 0
    %92 = vmatprep.subr.mxu0 0.0
    %93 = vmatpush1.msra.mxu0 %v56
    %94 = vmatprep.subr.mxu0 0.0
    %95 = vmatpush1.msra.mxu0 %v57
    %96 = vmatprep.subr.mxu0 0.0
    %97 = vmatpush1.msra.mxu0 %v58
    %98 = vmatprep.subr.mxu0 0.0
    %99 = vmatpush1.msra.mxu0 %v59
    %100 = vmatprep.subr.mxu0 0.0
    %101 = vmatpush1.msra.mxu0 0.0
    %102 = vmatprep.subr.mxu0 0.0
    %103 = vmatpush1.msra.mxu0 0.0
    %104 = vmatprep.subr.mxu0 0.0
    %105 = vmatpush1.msra.mxu0 0.0
    %106 = vmatprep.subr.mxu0 0.0
    %107 = vmatpush1.msra.mxu0 0.0
    %108 = vmatprep.subr.mxu0 0.0
    %109 = vmatpush1.msra.mxu0 0.0
    %110 = vmatprep.subr.mxu0 0.0
    %111 = vmatpush1.msra.mxu0 0.0
    %112 = vmatprep.subr.mxu0 0.0
    %113 = vmatpush1.msra.mxu0 0.0
    %114 = vmatprep.subr.mxu0 0.0
    %115 = vmatpush1.msra.mxu0 0.0
    %116 = vmatprep.subr.mxu0 0.0
    %117 = vmatpush1.msra.mxu0 0.0
    %118 = vmatprep.subr.mxu0 0.0
    %119 = vmatpush1.msra.mxu0 0.0
    %120 = vmatprep.subr.mxu0 0.0
    %121 = vmatpush1.msra.mxu0 0.0
    %122 = vmatprep.subr.mxu0 0.0
    %123 = vmatpush1.msra.mxu0 0.0
    %124 = vmatprep.subr.mxu0 0.0
    %125 = vmatpush1.msra.mxu0 0.0
    %126 = vmatprep.subr.mxu0 0.0
    %127 = vmatpush1.msra.mxu0 0.0
    %128 = vmatprep.subr.mxu0 0.0
    %129 = vmatpush1.msra.mxu0 0.0
    %130 = vmatprep.subr.mxu0 0.0
    %131 = vmatpush1.msra.mxu0 0.0
    %132 = vmatprep.subr.mxu0 0.0
    %133 = vmatpush1.msra.mxu0 0.0
    %134 = vmatprep.subr.mxu0 0.0
    %135 = vmatpush1.msra.mxu0 0.0
    %136 = vmatprep.subr.mxu0 0.0
    %137 = vmatpush1.msra.mxu0 0.0
    %138 = vmatprep.subr.mxu0 0.0
    %139 = vmatpush1.msra.mxu0 0.0
    %140 = vmatprep.subr.mxu0 0.0
    %141 = vmatpush1.msra.mxu0 0.0
    %142 = vmatprep.subr.mxu0 0.0
    %143 = vmatpush1.msra.mxu0 0.0
    %144 = vmatprep.subr.mxu0 0.0
    %145 = vmatpush1.msra.mxu0 0.0
    %146 = vmatprep.subr.mxu0 0.0
    %147 = vmatpush1.msra.mxu0 0.0
    %148 = vmatprep.subr.mxu0 0.0
    %149 = vmatpush1.msra.mxu0 0.0
    %150 = vmatprep.subr.mxu0 0.0
    %151 = vmatpush1.msra.mxu0 0.0
    %152 = vmatprep.subr.mxu0 0.0
    %153 = vmatpush1.msra.mxu0 0.0
    %154 = vmatprep.subr.mxu0 0.0
    %155 = vmatpush1.msra.mxu0 0.0
    %156 = vmatprep.mubr.f32.mxu0 0.0
    %157 = vmatmul.mubr.f32.gmra.mrb[0].mxu0 %v69
    %v158 = vpop.f32.mrb[0].mxu0
    %v159 = vadd.f32 %v65, %v158
    %v160 = vpop.f32.mrb[0].mxu0
    %161 = vmatprep.mubr.f32.mxu0 0.0
    %162 = vmatmul.mubr.f32.gmra.mrb[0].mxu0 %v72
    %v163 = vpop.f32.mrb[0].mxu0
    %v164 = vadd.f32 %v65, %v163
    %v165 = vpop.f32.mrb[0].mxu0
    %166 = vmatprep.mubr.f32.mxu0 0.0
    %167 = vmatmul.mubr.f32.gmra.mrb[0].mxu0 %v75
    %v168 = vpop.f32.mrb[0].mxu0
    %v169 = vadd.f32 %v65, %v168
    %v170 = vpop.f32.mrb[0].mxu0
    %171 = vmatprep.mubr.f32.mxu0 0.0
    %172 = vmatmul.mubr.f32.gmra.mrb[0].mxu0 %v78
    %v173 = vpop.f32.mrb[0].mxu0
    %v174 = vadd.f32 %v65, %v173
    %v175 = vpop.f32.mrb[0].mxu0
    %176 = vmatprep.mubr.f32.mxu0 0.0
    %177 = vmatmul.mubr.f32.gmra.mrb[0].mxu0 %v81
    %v178 = vpop.f32.mrb[0].mxu0
    %v179 = vadd.f32 %v65, %v178
    %v180 = vpop.f32.mrb[0].mxu0
    %181 = vmatprep.mubr.f32.mxu0 0.0
    %182 = vmatmul.mubr.f32.gmra.mrb[0].mxu0 %v84
    %v183 = vpop.f32.mrb[0].mxu0
    %v184 = vadd.f32 %v65, %v183
    %v185 = vpop.f32.mrb[0].mxu0
    %186 = vmatprep.mubr.f32.mxu0 0.0
    %187 = vmatmul.mubr.f32.gmra.mrb[0].mxu0 %v87
    %v188 = vpop.f32.mrb[0].mxu0
    %v189 = vadd.f32 %v65, %v188
    %v190 = vpop.f32.mrb[0].mxu0
    %191 = vmatprep.mubr.f32.mxu0 0.0
    %192 = vmatmul.mubr.f32.gmra.mrb[0].mxu0 %v90
    %v193 = vpop.f32.mrb[0].mxu0
    %v194 = vadd.f32 %v65, %v193
    %v195 = vpop.f32.mrb[0].mxu0
    %196 = vdwg.mxu0
    %vm197 = vcmask 31744
    %v198 = vsel %vm197, %v159, -inf
    %v199 = vrot.slane %v198, 4
    %v200 = vmax.f32 %v198, %v199
    %v201 = vrot.slane %v200, 2
    %v202 = vmax.f32 %v200, %v201
    %v203 = vrot.slane %v202, 1
    %v204 = vmax.f32 %v202, %v203
    %v205 = vsel %vm197, %v164, -inf
    %v206 = vrot.slane %v205, 4
    %v207 = vmax.f32 %v205, %v206
    %v208 = vrot.slane %v207, 2
    %v209 = vmax.f32 %v207, %v208
    %v210 = vrot.slane %v209, 1
    %v211 = vmax.f32 %v209, %v210
    %v212 = vsel %vm197, %v169, -inf
    %v213 = vrot.slane %v212, 4
    %v214 = vmax.f32 %v212, %v213
    %v215 = vrot.slane %v214, 2
    %v216 = vmax.f32 %v214, %v215
    %v217 = vrot.slane %v216, 1
    %v218 = vmax.f32 %v216, %v217
    %v219 = vsel %vm197, %v174, -inf
    %v220 = vrot.slane %v219, 4
    %v221 = vmax.f32 %v219, %v220
    %v222 = vrot.slane %v221, 2
    %v223 = vmax.f32 %v221, %v222
    %v224 = vrot.slane %v223, 1
    %v225 = vmax.f32 %v223, %v224
    %v226 = vsel %vm197, %v179, -inf
    %v227 = vrot.slane %v226, 4
    %v228 = vmax.f32 %v226, %v227
    %v229 = vrot.slane %v228, 2
    %v230 = vmax.f32 %v228, %v229
    %v231 = vrot.slane %v230, 1
    %v232 = vmax.f32 %v230, %v231
    %v233 = vsel %vm197, %v184, -inf
    %v234 = vrot.slane %v233, 4
    %v235 = vmax.f32 %v233, %v234
    %v236 = vrot.slane %v235, 2
    %v237 = vmax.f32 %v235, %v236
    %v238 = vrot.slane %v237, 1
    %v239 = vmax.f32 %v237, %v238
    %v240 = vsel %vm197, %v189, -inf
    %v241 = vrot.slane %v240, 4
    %v242 = vmax.f32 %v240, %v241
    %v243 = vrot.slane %v242, 2
    %v244 = vmax.f32 %v242, %v243
    %v245 = vrot.slane %v244, 1
    %v246 = vmax.f32 %v244, %v245
    %v247 = vsel %vm197, %v194, -inf
    %v248 = vrot.slane %v247, 4
    %v249 = vmax.f32 %v247, %v248
    %v250 = vrot.slane %v249, 2
    %v251 = vmax.f32 %v249, %v250
    %v252 = vrot.slane %v251, 1
    %v253 = vmax.f32 %v251, %v252
    %v254 = vsub.f32 %v159, %v204
    %v255 = vsub.f32 %v164, %v211
    %v256 = vsub.f32 %v169, %v218
    %v257 = vsub.f32 %v174, %v225
    %v258 = vsub.f32 %v179, %v232
    %v259 = vsub.f32 %v184, %v239
    %v260 = vsub.f32 %v189, %v246
    %v261 = vsub.f32 %v194, %v253
    %v262 = vmul.f32 %v254, 1.442695
    %v263 = vpow.pop %v262
    %v264 = vmul.f32 %v255, 1.442695
    %v265 = vpow.pop %v264
    %v266 = vmul.f32 %v256, 1.442695
    %v267 = vpow.pop %v266
    %v268 = vmul.f32 %v257, 1.442695
    %v269 = vpow.pop %v268
    %v270 = vmul.f32 %v258, 1.442695
    %v271 = vpow.pop %v270
    %v272 = vmul.f32 %v259, 1.442695
    %v273 = vpow.pop %v272
    %v274 = vmul.f32 %v260, 1.442695
    %v275 = vpow.pop %v274
    %v276 = vmul.f32 %v261, 1.442695
    %v277 = vpow.pop %v276
    %v278 = vsel %vm197, %v263, 0.0
    %v279 = vrot.slane %v278, 4
    %v280 = vadd.f32 %v278, %v279
    %v281 = vrot.slane %v280, 2
    %v282 = vadd.f32 %v280, %v281
    %v283 = vrot.slane %v282, 1
    %v284 = vadd.f32 %v282, %v283
    %v285 = vsel %vm197, %v265, 0.0
    %v286 = vrot.slane %v285, 4
    %v287 = vadd.f32 %v285, %v286
    %v288 = vrot.slane %v287, 2
    %v289 = vadd.f32 %v287, %v288
    %v290 = vrot.slane %v289, 1
    %v291 = vadd.f32 %v289, %v290
    %v292 = vsel %vm197, %v267, 0.0
    %v293 = vrot.slane %v292, 4
    %v294 = vadd.f32 %v292, %v293
    %v295 = vrot.slane %v294, 2
    %v296 = vadd.f32 %v294, %v295
    %v297 = vrot.slane %v296, 1
    %v298 = vadd.f32 %v296, %v297
    %v299 = vsel %vm197, %v269, 0.0
    %v300 = vrot.slane %v299, 4
    %v301 = vadd.f32 %v299, %v300
    %v302 = vrot.slane %v301, 2
    %v303 = vadd.f32 %v301, %v302
    %v304 = vrot.slane %v303, 1
    %v305 = vadd.f32 %v303, %v304
    %v306 = vsel %vm197, %v271, 0.0
    %v307 = vrot.slane %v306, 4
    %v308 = vadd.f32 %v306, %v307
    %v309 = vrot.slane %v308, 2
    %v310 = vadd.f32 %v308, %v309
    %v311 = vrot.slane %v310, 1
    %v312 = vadd.f32 %v310, %v311
    %v313 = vsel %vm197, %v273, 0.0
    %v314 = vrot.slane %v313, 4
    %v315 = vadd.f32 %v313, %v314
    %v316 = vrot.slane %v315, 2
    %v317 = vadd.f32 %v315, %v316
    %v318 = vrot.slane %v317, 1
    %v319 = vadd.f32 %v317, %v318
    %v320 = vsel %vm197, %v275, 0.0
    %v321 = vrot.slane %v320, 4
    %v322 = vadd.f32 %v320, %v321
    %v323 = vrot.slane %v322, 2
    %v324 = vadd.f32 %v322, %v323
    %v325 = vrot.slane %v324, 1
    %v326 = vadd.f32 %v324, %v325
    %v327 = vsel %vm197, %v277, 0.0
    %v328 = vrot.slane %v327, 4
    %v329 = vadd.f32 %v327, %v328
    %v330 = vrot.slane %v329, 2
    %v331 = vadd.f32 %v329, %v330
    %v332 = vrot.slane %v331, 1
    %v333 = vadd.f32 %v331, %v332
    %v334 = vrcp.pop %v284
    %v335 = vrcp.pop %v291
    %v336 = vrcp.pop %v298
    %v337 = vrcp.pop %v305
    %v338 = vrcp.pop %v312
    %v339 = vrcp.pop %v319
    %v340 = vrcp.pop %v326
    %v341 = vrcp.pop %v333
    %v342 = vmul.f32 %v263, %v334
    %v343 = vmul.f32 %v265, %v335
    %v344 = vmul.f32 %v267, %v336
    %v345 = vmul.f32 %v269, %v337
    %v346 = vmul.f32 %v271, %v338
    %v347 = vmul.f32 %v273, %v339
    %v348 = vmul.f32 %v275, %v340
    %v349 = vmul.f32 %v277, %v341
    %v350 = vld [vmem:[%s4] sm:$0xff]
    %v351 = vld [vmem:[%s4 + $0x8] sm:$0xff]
    %v352 = vld [vmem:[%s4 + $0x10] sm:$0xff]
    %v353 = vld [vmem:[%s4 + $0x18] sm:$0xff]
    %354 = vmatprep.subr.mxu0 0.0
    %355 = vmatpush1.msra.mxu0 %v350
    %356 = vmatprep.subr.mxu0 0.0
    %357 = vmatpush1.msra.mxu0 %v351
    %358 = vmatprep.subr.mxu0 0.0
    %359 = vmatpush1.msra.mxu0 %v352
    %360 = vmatprep.subr.mxu0 0.0
    %361 = vmatpush1.msra.mxu0 %v353
    %362 = vmatprep.subr.mxu0 0.0
    %363 = vmatpush1.msra.mxu0 0.0
    %364 = vmatprep.subr.mxu0 0.0
    %365 = vmatpush1.msra.mxu0 0.0
    %366 = vmatprep.subr.mxu0 0.0
    %367 = vmatpush1.msra.mxu0 0.0
    %368 = vmatprep.subr.mxu0 0.0
    %369 = vmatpush1.msra.mxu0 0.0
    %370 = vmatprep.subr.mxu0 0.0
    %371 = vmatpush1.msra.mxu0 0.0
    %372 = vmatprep.subr.mxu0 0.0
    %373 = vmatpush1.msra.mxu0 0.0
    %374 = vmatprep.subr.mxu0 0.0
    %375 = vmatpush1.msra.mxu0 0.0
    %376 = vmatprep.subr.mxu0 0.0
    %377 = vmatpush1.msra.mxu0 0.0
    %378 = vmatprep.subr.mxu0 0.0
    %379 = vmatpush1.msra.mxu0 0.0
    %380 = vmatprep.subr.mxu0 0.0
    %381 = vmatpush1.msra.mxu0 0.0
    %382 = vmatprep.subr.mxu0 0.0
    %383 = vmatpush1.msra.mxu0 0.0
    %384 = vmatprep.subr.mxu0 0.0
    %385 = vmatpush1.msra.mxu0 0.0
    %386 = vmatprep.subr.mxu0 0.0
    %387 = vmatpush1.msra.mxu0 0.0
    %388 = vmatprep.subr.mxu0 0.0
    %389 = vmatpush1.msra.mxu0 0.0
    %390 = vmatprep.subr.mxu0 0.0
    %391 = vmatpush1.msra.mxu0 0.0
    %392 = vmatprep.subr.mxu0 0.0
    %393 = vmatpush1.msra.mxu0 0.0
    %394 = vmatprep.subr.mxu0 0.0
    %395 = vmatpush1.msra.mxu0 0.0
    %396 = vmatprep.subr.mxu0 0.0
    %397 = vmatpush1.msra.mxu0 0.0
    %398 = vmatprep.subr.mxu0 0.0
    %399 = vmatpush1.msra.mxu0 0.0
    %400 = vmatprep.subr.mxu0 0.0
    %401 = vmatpush1.msra.mxu0 0.0
    %402 = vmatprep.subr.mxu0 0.0
    %403 = vmatpush1.msra.mxu0 0.0
    %404 = vmatprep.subr.mxu0 0.0
    %405 = vmatpush1.msra.mxu0 0.0
    %406 = vmatprep.subr.mxu0 0.0
    %407 = vmatpush1.msra.mxu0 0.0
    %408 = vmatprep.subr.mxu0 0.0
    %409 = vmatpush1.msra.mxu0 0.0
    %410 = vmatprep.subr.mxu0 0.0
    %411 = vmatpush1.msra.mxu0 0.0
    %412 = vmatprep.subr.mxu0 0.0
    %413 = vmatpush1.msra.mxu0 0.0
    %414 = vmatprep.subr.mxu0 0.0
    %415 = vmatpush1.msra.mxu0 0.0
    %416 = vmatprep.subr.mxu0 0.0
    %417 = vmatpush1.msra.mxu0 0.0
    %418 = vmatprep.mubr.f32.mxu0 0.0
    %419 = vmatmul.mubr.f32.gmra.mrb[0].mxu0 %v69
    %v420 = vpop.f32.mrb[0].mxu0
    %v421 = vadd.f32 0.0, %v420
    %v422 = vpop.f32.mrb[0].mxu0
    %423 = vmatprep.mubr.f32.mxu0 0.0
    %424 = vmatmul.mubr.f32.gmra.mrb[0].mxu0 %v72
    %v425 = vpop.f32.mrb[0].mxu0
    %v426 = vadd.f32 0.0, %v425
    %v427 = vpop.f32.mrb[0].mxu0
    %428 = vmatprep.mubr.f32.mxu0 0.0
    %429 = vmatmul.mubr.f32.gmra.mrb[0].mxu0 %v75
    %v430 = vpop.f32.mrb[0].mxu0
    %v431 = vadd.f32 0.0, %v430
    %v432 = vpop.f32.mrb[0].mxu0
    %433 = vmatprep.mubr.f32.mxu0 0.0
    %434 = vmatmul.mubr.f32.gmra.mrb[0].mxu0 %v78
    %v435 = vpop.f32.mrb[0].mxu0
    %v436 = vadd.f32 0.0, %v435
    %v437 = vpop.f32.mrb[0].mxu0
    %438 = vmatprep.mubr.f32.mxu0 0.0
    %439 = vmatmul.mubr.f32.gmra.mrb[0].mxu0 %v81
    %v440 = vpop.f32.mrb[0].mxu0
    %v441 = vadd.f32 0.0, %v440
    %v442 = vpop.f32.mrb[0].mxu0
    %443 = vmatprep.mubr.f32.mxu0 0.0
    %444 = vmatmul.mubr.f32.gmra.mrb[0].mxu0 %v84
    %v445 = vpop.f32.mrb[0].mxu0
    %v446 = vadd.f32 0.0, %v445
    %v447 = vpop.f32.mrb[0].mxu0
    %448 = vmatprep.mubr.f32.mxu0 0.0
    %449 = vmatmul.mubr.f32.gmra.mrb[0].mxu0 %v87
    %v450 = vpop.f32.mrb[0].mxu0
    %v451 = vadd.f32 0.0, %v450
    %v452 = vpop.f32.mrb[0].mxu0
    %453 = vmatprep.mubr.f32.mxu0 0.0
    %454 = vmatmul.mubr.f32.gmra.mrb[0].mxu0 %v90
    %v455 = vpop.f32.mrb[0].mxu0
    %v456 = vadd.f32 0.0, %v455
    %v457 = vpop.f32.mrb[0].mxu0
    %458 = vdwg.mxu0
    %v459 = vld [vmem:[%s3] sm:$0xf]
    %v461 = vsel %vm197, %v342, 0
    %v464 = vsel %vm197, %v343, 0
    %v467 = vsel %vm197, %v344, 0
    %v470 = vsel %vm197, %v345, 0
    %v473 = vsel %vm197, %v346, 0
    %v476 = vsel %vm197, %v347, 0
    %v479 = vsel %vm197, %v348, 0
    %v482 = vsel %vm197, %v349, 0
    %vm484 = vcmask 1043456
    %v486 = vsel %vm484, %v459, 0
    %488 = vmatprep.subr.mxu0 0.0
    %489 = vmatpush1.msra.mxu0 %v486
    %490 = vmatprep.subr.mxu0 0.0
    %491 = vmatpush1.msra.mxu0 0.0
    %492 = vmatprep.subr.mxu0 0.0
    %493 = vmatpush1.msra.mxu0 0.0
    %494 = vmatprep.subr.mxu0 0.0
    %495 = vmatpush1.msra.mxu0 0.0
    %496 = vmatprep.subr.mxu0 0.0
    %497 = vmatpush1.msra.mxu0 0.0
    %498 = vmatprep.subr.mxu0 0.0
    %499 = vmatpush1.msra.mxu0 0.0
    %500 = vmatprep.subr.mxu0 0.0
    %501 = vmatpush1.msra.mxu0 0.0
    %502 = vmatprep.subr.mxu0 0.0
    %503 = vmatpush1.msra.mxu0 0.0
    %504 = vmatprep.subr.mxu0 0.0
    %505 = vmatpush1.msra.mxu0 0.0
    %506 = vmatprep.subr.mxu0 0.0
    %507 = vmatpush1.msra.mxu0 0.0
    %508 = vmatprep.subr.mxu0 0.0
    %509 = vmatpush1.msra.mxu0 0.0
    %510 = vmatprep.subr.mxu0 0.0
    %511 = vmatpush1.msra.mxu0 0.0
    %512 = vmatprep.subr.mxu0 0.0
    %513 = vmatpush1.msra.mxu0 0.0
    %514 = vmatprep.subr.mxu0 0.0
    %515 = vmatpush1.msra.mxu0 0.0
    %516 = vmatprep.subr.mxu0 0.0
    %517 = vmatpush1.msra.mxu0 0.0
    %518 = vmatprep.subr.mxu0 0.0
    %519 = vmatpush1.msra.mxu0 0.0
    %520 = vmatprep.subr.mxu0 0.0
    %521 = vmatpush1.msra.mxu0 0.0
    %522 = vmatprep.subr.mxu0 0.0
    %523 = vmatpush1.msra.mxu0 0.0
    %524 = vmatprep.subr.mxu0 0.0
    %525 = vmatpush1.msra.mxu0 0.0
    %526 = vmatprep.subr.mxu0 0.0
    %527 = vmatpush1.msra.mxu0 0.0
    %528 = vmatprep.subr.mxu0 0.0
    %529 = vmatpush1.msra.mxu0 0.0
    %530 = vmatprep.subr.mxu0 0.0
    %531 = vmatpush1.msra.mxu0 0.0
    %532 = vmatprep.subr.mxu0 0.0
    %533 = vmatpush1.msra.mxu0 0.0
    %534 = vmatprep.subr.mxu0 0.0
    %535 = vmatpush1.msra.mxu0 0.0
    %536 = vmatprep.subr.mxu0 0.0
    %537 = vmatpush1.msra.mxu0 0.0
    %538 = vmatprep.subr.mxu0 0.0
    %539 = vmatpush1.msra.mxu0 0.0
    %540 = vmatprep.subr.mxu0 0.0
    %541 = vmatpush1.msra.mxu0 0.0
    %542 = vmatprep.subr.mxu0 0.0
    %543 = vmatpush1.msra.mxu0 0.0
    %544 = vmatprep.subr.mxu0 0.0
    %545 = vmatpush1.msra.mxu0 0.0
    %546 = vmatprep.subr.mxu0 0.0
    %547 = vmatpush1.msra.mxu0 0.0
    %548 = vmatprep.subr.mxu0 0.0
    %549 = vmatpush1.msra.mxu0 0.0
    %550 = vmatprep.subr.mxu0 0.0
    %551 = vmatpush1.msra.mxu0 0.0
    %552 = vmatprep.mubr.f32.mxu0 0.0
    %553 = vmatmul.mubr.f32.gmra.mrb[0].mxu0 %v461
    %v554 = vpop.f32.mrb[0].mxu0
    %v555 = vadd.f32 0.0, %v554
    %v556 = vpop.f32.mrb[0].mxu0
    %557 = vmatprep.mubr.f32.mxu0 0.0
    %558 = vmatmul.mubr.f32.gmra.mrb[0].mxu0 %v464
    %v559 = vpop.f32.mrb[0].mxu0
    %v560 = vadd.f32 0.0, %v559
    %v561 = vpop.f32.mrb[0].mxu0
    %562 = vmatprep.mubr.f32.mxu0 0.0
    %563 = vmatmul.mubr.f32.gmra.mrb[0].mxu0 %v467
    %v564 = vpop.f32.mrb[0].mxu0
    %v565 = vadd.f32 0.0, %v564
    %v566 = vpop.f32.mrb[0].mxu0
    %567 = vmatprep.mubr.f32.mxu0 0.0
    %568 = vmatmul.mubr.f32.gmra.mrb[0].mxu0 %v470
    %v569 = vpop.f32.mrb[0].mxu0
    %v570 = vadd.f32 0.0, %v569
    %v571 = vpop.f32.mrb[0].mxu0
    %572 = vmatprep.mubr.f32.mxu0 0.0
    %573 = vmatmul.mubr.f32.gmra.mrb[0].mxu0 %v473
    %v574 = vpop.f32.mrb[0].mxu0
    %v575 = vadd.f32 0.0, %v574
    %v576 = vpop.f32.mrb[0].mxu0
    %577 = vmatprep.mubr.f32.mxu0 0.0
    %578 = vmatmul.mubr.f32.gmra.mrb[0].mxu0 %v476
    %v579 = vpop.f32.mrb[0].mxu0
    %v580 = vadd.f32 0.0, %v579
    %v581 = vpop.f32.mrb[0].mxu0
    %582 = vmatprep.mubr.f32.mxu0 0.0
    %583 = vmatmul.mubr.f32.gmra.mrb[0].mxu0 %v479
    %v584 = vpop.f32.mrb[0].mxu0
    %v585 = vadd.f32 0.0, %v584
    %v586 = vpop.f32.mrb[0].mxu0
    %587 = vmatprep.mubr.f32.mxu0 0.0
    %588 = vmatmul.mubr.f32.gmra.mrb[0].mxu0 %v482
    %v589 = vpop.f32.mrb[0].mxu0
    %v590 = vadd.f32 0.0, %v589
    %v591 = vpop.f32.mrb[0].mxu0
    %592 = vdwg.mxu0
    %v593 = vmul.f32 %v555, %v421
    %v594 = vmul.f32 %v560, %v426
    %v595 = vmul.f32 %v565, %v431
    %v596 = vmul.f32 %v570, %v436
    %v597 = vmul.f32 %v575, %v441
    %v598 = vmul.f32 %v580, %v446
    %v599 = vmul.f32 %v585, %v451
    %v600 = vmul.f32 %v590, %v456
    %v601 = vsel %vm67, %v593, 0.0
    %v602 = vrot.slane %v601, 4
    %v603 = vadd.f32 %v601, %v602
    %v604 = vrot.slane %v603, 2
    %v605 = vadd.f32 %v603, %v604
    %v606 = vrot.slane %v605, 1
    %v607 = vadd.f32 %v605, %v606
    %v608 = vsel %vm67, %v594, 0.0
    %v609 = vrot.slane %v608, 4
    %v610 = vadd.f32 %v608, %v609
    %v611 = vrot.slane %v610, 2
    %v612 = vadd.f32 %v610, %v611
    %v613 = vrot.slane %v612, 1
    %v614 = vadd.f32 %v612, %v613
    %v615 = vsel %vm67, %v595, 0.0
    %v616 = vrot.slane %v615, 4
    %v617 = vadd.f32 %v615, %v616
    %v618 = vrot.slane %v617, 2
    %v619 = vadd.f32 %v617, %v618
    %v620 = vrot.slane %v619, 1
    %v621 = vadd.f32 %v619, %v620
    %v622 = vsel %vm67, %v596, 0.0
    %v623 = vrot.slane %v622, 4
    %v624 = vadd.f32 %v622, %v623
    %v625 = vrot.slane %v624, 2
    %v626 = vadd.f32 %v624, %v625
    %v627 = vrot.slane %v626, 1
    %v628 = vadd.f32 %v626, %v627
    %v629 = vsel %vm67, %v597, 0.0
    %v630 = vrot.slane %v629, 4
    %v631 = vadd.f32 %v629, %v630
    %v632 = vrot.slane %v631, 2
    %v633 = vadd.f32 %v631, %v632
    %v634 = vrot.slane %v633, 1
    %v635 = vadd.f32 %v633, %v634
    %v636 = vsel %vm67, %v598, 0.0
    %v637 = vrot.slane %v636, 4
    %v638 = vadd.f32 %v636, %v637
    %v639 = vrot.slane %v638, 2
    %v640 = vadd.f32 %v638, %v639
    %v641 = vrot.slane %v640, 1
    %v642 = vadd.f32 %v640, %v641
    %v643 = vsel %vm67, %v599, 0.0
    %v644 = vrot.slane %v643, 4
    %v645 = vadd.f32 %v643, %v644
    %v646 = vrot.slane %v645, 2
    %v647 = vadd.f32 %v645, %v646
    %v648 = vrot.slane %v647, 1
    %v649 = vadd.f32 %v647, %v648
    %v650 = vsel %vm67, %v600, 0.0
    %v651 = vrot.slane %v650, 4
    %v652 = vadd.f32 %v650, %v651
    %v653 = vrot.slane %v652, 2
    %v654 = vadd.f32 %v652, %v653
    %v655 = vrot.slane %v654, 1
    %v656 = vadd.f32 %v654, %v655
    %v657 = vld [vmem:[%s5] sm:$0x1]
    %v659 = vlaneseq
    %v660 = vshrl.u32 %v659, 7
    %v661 = vsub.s32 0, %v660
    %v662 = vrot.slane %v657, %v661
    %v664 = vadd.f32 %v607, %v662
    %v665 = vadd.f32 %v614, %v662
    %v666 = vadd.f32 %v621, %v662
    %v667 = vadd.f32 %v628, %v662
    %v668 = vadd.f32 %v635, %v662
    %v669 = vadd.f32 %v642, %v662
    %v670 = vadd.f32 %v649, %v662
    %v671 = vadd.f32 %v656, %v662
    %v672 = vld [vmem:[%s6] sm:$0xff]
    %v673 = vld [vmem:[%s6 + $0x8] sm:$0xff]
    %v674 = vld [vmem:[%s6 + $0x10] sm:$0xff]
    %v675 = vld [vmem:[%s6 + $0x18] sm:$0xff]
    %v676 = vld [vmem:[%s7] sm:$0x1]
    %v678 = vlaneseq
    %v679 = vshrl.u32 %v678, 7
    %v680 = vsub.s32 0, %v679
    %v681 = vrot.slane %v676, %v680
    %v691 = vrot.slane %v665, 7
    %vm692 = vcmask 1041409
    %v693 = vsel %vm692, %v691, %v664
    %v694 = vrot.slane %v666, 6
    %vm695 = vcmask 1042434
    %v696 = vsel %vm695, %v694, %v693
    %v697 = vrot.slane %v667, 5
    %vm698 = vcmask 1043459
    %v699 = vsel %vm698, %v697, %v696
    %v700 = vrot.slane %v668, 4
    %vm701 = vcmask 1044484
    %v702 = vsel %vm701, %v700, %v699
    %v703 = vrot.slane %v669, 3
    %vm704 = vcmask 1045509
    %v705 = vsel %vm704, %v703, %v702
    %v706 = vrot.slane %v670, 2
    %vm707 = vcmask 1046534
    %v708 = vsel %vm707, %v706, %v705
    %v709 = vrot.slane %v671, 1
    %vm710 = vcmask 1047559
    %v711 = vsel %vm710, %v709, %v708
    %v712 = vsel %vm67, %v711, 0
    %714 = vmatprep.subr.mxu0 0.0
    %715 = vmatpush1.msra.mxu0 %v672
    %716 = vmatprep.subr.mxu0 0.0
    %717 = vmatpush1.msra.mxu0 %v673
    %718 = vmatprep.subr.mxu0 0.0
    %719 = vmatpush1.msra.mxu0 %v674
    %720 = vmatprep.subr.mxu0 0.0
    %721 = vmatpush1.msra.mxu0 %v675
    %722 = vmatprep.subr.mxu0 0.0
    %723 = vmatpush1.msra.mxu0 0.0
    %724 = vmatprep.subr.mxu0 0.0
    %725 = vmatpush1.msra.mxu0 0.0
    %726 = vmatprep.subr.mxu0 0.0
    %727 = vmatpush1.msra.mxu0 0.0
    %728 = vmatprep.subr.mxu0 0.0
    %729 = vmatpush1.msra.mxu0 0.0
    %730 = vmatprep.subr.mxu0 0.0
    %731 = vmatpush1.msra.mxu0 0.0
    %732 = vmatprep.subr.mxu0 0.0
    %733 = vmatpush1.msra.mxu0 0.0
    %734 = vmatprep.subr.mxu0 0.0
    %735 = vmatpush1.msra.mxu0 0.0
    %736 = vmatprep.subr.mxu0 0.0
    %737 = vmatpush1.msra.mxu0 0.0
    %738 = vmatprep.subr.mxu0 0.0
    %739 = vmatpush1.msra.mxu0 0.0
    %740 = vmatprep.subr.mxu0 0.0
    %741 = vmatpush1.msra.mxu0 0.0
    %742 = vmatprep.subr.mxu0 0.0
    %743 = vmatpush1.msra.mxu0 0.0
    %744 = vmatprep.subr.mxu0 0.0
    %745 = vmatpush1.msra.mxu0 0.0
    %746 = vmatprep.subr.mxu0 0.0
    %747 = vmatpush1.msra.mxu0 0.0
    %748 = vmatprep.subr.mxu0 0.0
    %749 = vmatpush1.msra.mxu0 0.0
    %750 = vmatprep.subr.mxu0 0.0
    %751 = vmatpush1.msra.mxu0 0.0
    %752 = vmatprep.subr.mxu0 0.0
    %753 = vmatpush1.msra.mxu0 0.0
    %754 = vmatprep.subr.mxu0 0.0
    %755 = vmatpush1.msra.mxu0 0.0
    %756 = vmatprep.subr.mxu0 0.0
    %757 = vmatpush1.msra.mxu0 0.0
    %758 = vmatprep.subr.mxu0 0.0
    %759 = vmatpush1.msra.mxu0 0.0
    %760 = vmatprep.subr.mxu0 0.0
    %761 = vmatpush1.msra.mxu0 0.0
    %762 = vmatprep.subr.mxu0 0.0
    %763 = vmatpush1.msra.mxu0 0.0
    %764 = vmatprep.subr.mxu0 0.0
    %765 = vmatpush1.msra.mxu0 0.0
    %766 = vmatprep.subr.mxu0 0.0
    %767 = vmatpush1.msra.mxu0 0.0
    %768 = vmatprep.subr.mxu0 0.0
    %769 = vmatpush1.msra.mxu0 0.0
    %770 = vmatprep.subr.mxu0 0.0
    %771 = vmatpush1.msra.mxu0 0.0
    %772 = vmatprep.subr.mxu0 0.0
    %773 = vmatpush1.msra.mxu0 0.0
    %774 = vmatprep.subr.mxu0 0.0
    %775 = vmatpush1.msra.mxu0 0.0
    %776 = vmatprep.subr.mxu0 0.0
    %777 = vmatpush1.msra.mxu0 0.0
    %778 = vmatprep.mubr.f32.mxu0 0.0
    %779 = vmatmul.mubr.f32.gmra.mrb[0].mxu0 %v712
    %v780 = vpop.f32.mrb[0].mxu0
    %v781 = vadd.f32 %v681, %v780
    %v782 = vpop.f32.mrb[0].mxu0
    %783 = vdwg.mxu0
    %v784 = vsel %vm67, %v781, 0.0
    %785 = vadd.xlane.f32.xlu0 %v784
    %v786 = vpop.xlane.xlu0 %785
    %v787 = vrcp.pop 32.0
    %v788 = vmul.f32 %v786, %v787
    %v789 = vsub.f32 %v781, %v788
    %v790 = vmul.f32 %v789, %v789
    %v791 = vsel %vm67, %v790, 0.0
    %792 = vadd.xlane.f32.xlu0 %v791
    %v793 = vpop.xlane.xlu0 %792
    %v794 = vmul.f32 %v793, %v787
    %v795 = vadd.f32 %v794, 1e-05
    %v796 = vrsqrt.pop %v795
    %v797 = vmul.f32 %v789, %v796
    %v798 = vld [vmem:[%s8] sm:$0x1]
    %v800 = vlaneseq
    %v801 = vshrl.u32 %v800, 7
    %v802 = vsub.s32 0, %v801
    %v803 = vrot.slane %v798, %v802
    %v805 = vmul.f32 %v797, %v803
    %v806 = vld [vmem:[%s9] sm:$0x1]
    %v808 = vlaneseq
    %v809 = vshrl.u32 %v808, 7
    %v810 = vsub.s32 0, %v809
    %v811 = vrot.slane %v806, %v810
    %v813 = vadd.f32 %v805, %v811
    %v814 = vld [vmem:[%s10] sm:$0xff]
    %v815 = vld [vmem:[%s10 + $0x8] sm:$0xff]
    %v816 = vld [vmem:[%s10 + $0x10] sm:$0xff]
    %v817 = vld [vmem:[%s10 + $0x18] sm:$0xff]
    %v818 = vld [vmem:[%s11] sm:$0x1]
    %v820 = vlaneseq
    %v821 = vshrl.u32 %v820, 7
    %v822 = vsub.s32 0, %v821
    %v823 = vrot.slane %v818, %v822
    %v826 = vsel %vm67, %v813, 0
    %828 = vmatprep.subr.mxu0 0.0
    %829 = vmatpush1.msra.mxu0 %v814
    %830 = vmatprep.subr.mxu0 0.0
    %831 = vmatpush1.msra.mxu0 %v815
    %832 = vmatprep.subr.mxu0 0.0
    %833 = vmatpush1.msra.mxu0 %v816
    %834 = vmatprep.subr.mxu0 0.0
    %835 = vmatpush1.msra.mxu0 %v817
    %836 = vmatprep.subr.mxu0 0.0
    %837 = vmatpush1.msra.mxu0 0.0
    %838 = vmatprep.subr.mxu0 0.0
    %839 = vmatpush1.msra.mxu0 0.0
    %840 = vmatprep.subr.mxu0 0.0
    %841 = vmatpush1.msra.mxu0 0.0
    %842 = vmatprep.subr.mxu0 0.0
    %843 = vmatpush1.msra.mxu0 0.0
    %844 = vmatprep.subr.mxu0 0.0
    %845 = vmatpush1.msra.mxu0 0.0
    %846 = vmatprep.subr.mxu0 0.0
    %847 = vmatpush1.msra.mxu0 0.0
    %848 = vmatprep.subr.mxu0 0.0
    %849 = vmatpush1.msra.mxu0 0.0
    %850 = vmatprep.subr.mxu0 0.0
    %851 = vmatpush1.msra.mxu0 0.0
    %852 = vmatprep.subr.mxu0 0.0
    %853 = vmatpush1.msra.mxu0 0.0
    %854 = vmatprep.subr.mxu0 0.0
    %855 = vmatpush1.msra.mxu0 0.0
    %856 = vmatprep.subr.mxu0 0.0
    %857 = vmatpush1.msra.mxu0 0.0
    %858 = vmatprep.subr.mxu0 0.0
    %859 = vmatpush1.msra.mxu0 0.0
    %860 = vmatprep.subr.mxu0 0.0
    %861 = vmatpush1.msra.mxu0 0.0
    %862 = vmatprep.subr.mxu0 0.0
    %863 = vmatpush1.msra.mxu0 0.0
    %864 = vmatprep.subr.mxu0 0.0
    %865 = vmatpush1.msra.mxu0 0.0
    %866 = vmatprep.subr.mxu0 0.0
    %867 = vmatpush1.msra.mxu0 0.0
    %868 = vmatprep.subr.mxu0 0.0
    %869 = vmatpush1.msra.mxu0 0.0
    %870 = vmatprep.subr.mxu0 0.0
    %871 = vmatpush1.msra.mxu0 0.0
    %872 = vmatprep.subr.mxu0 0.0
    %873 = vmatpush1.msra.mxu0 0.0
    %874 = vmatprep.subr.mxu0 0.0
    %875 = vmatpush1.msra.mxu0 0.0
    %876 = vmatprep.subr.mxu0 0.0
    %877 = vmatpush1.msra.mxu0 0.0
    %878 = vmatprep.subr.mxu0 0.0
    %879 = vmatpush1.msra.mxu0 0.0
    %880 = vmatprep.subr.mxu0 0.0
    %881 = vmatpush1.msra.mxu0 0.0
    %882 = vmatprep.subr.mxu0 0.0
    %883 = vmatpush1.msra.mxu0 0.0
    %884 = vmatprep.subr.mxu0 0.0
    %885 = vmatpush1.msra.mxu0 0.0
    %886 = vmatprep.subr.mxu0 0.0
    %887 = vmatpush1.msra.mxu0 0.0
    %888 = vmatprep.subr.mxu0 0.0
    %889 = vmatpush1.msra.mxu0 0.0
    %890 = vmatprep.subr.mxu0 0.0
    %891 = vmatpush1.msra.mxu0 0.0
    %892 = vmatprep.mubr.f32.mxu0 0.0
    %893 = vmatmul.mubr.f32.gmra.mrb[0].mxu0 %v826
    %v894 = vpop.f32.mrb[0].mxu0
    %v895 = vadd.f32 %v823, %v894
    %v896 = vpop.f32.mrb[0].mxu0
    %897 = vdwg.mxu0
    %v898 = vmul.f32 %v895, 0.5
    %v899 = vmul.f32 %v895, 0.70710677
    %v900 = verf.f32.pop %v899
    %v901 = vadd.f32 %v900, 1.0
    %v902 = vmul.f32 %v898, %v901
    %v903 = vld [vmem:[%s12] sm:$0xff]
    %v904 = vld [vmem:[%s12 + $0x8] sm:$0xff]
    %v905 = vld [vmem:[%s12 + $0x10] sm:$0xff]
    %v906 = vld [vmem:[%s12 + $0x18] sm:$0xff]
    %v907 = vld [vmem:[%s12 + $0x20] sm:$0xff]
    %v908 = vld [vmem:[%s12 + $0x28] sm:$0xff]
    %v909 = vld [vmem:[%s12 + $0x30] sm:$0xff]
    %v910 = vld [vmem:[%s12 + $0x38] sm:$0xff]
    %v911 = vld [vmem:[%s12 + $0x40] sm:$0xff]
    %v912 = vld [vmem:[%s12 + $0x48] sm:$0xff]
    %v913 = vld [vmem:[%s12 + $0x50] sm:$0xff]
    %v914 = vld [vmem:[%s12 + $0x58] sm:$0xff]
    %v915 = vld [vmem:[%s12 + $0x60] sm:$0xff]
    %v916 = vld [vmem:[%s12 + $0x68] sm:$0xff]
    %v917 = vld [vmem:[%s12 + $0x70] sm:$0xff]
    %v918 = vld [vmem:[%s12 + $0x78] sm:$0xff]
    %v919 = vld [vmem:[%s13] sm:$0x1]
    %v921 = vlaneseq
    %v922 = vshrl.u32 %v921, 7
    %v923 = vsub.s32 0, %v922
    %v924 = vrot.slane %v919, %v923
    %926 = vmatprep.subr.mxu0 0.0
    %927 = vmatpush1.msra.mxu0 %v903
    %928 = vmatprep.subr.mxu0 0.0
    %929 = vmatpush1.msra.mxu0 %v904
    %930 = vmatprep.subr.mxu0 0.0
    %931 = vmatpush1.msra.mxu0 %v905
    %932 = vmatprep.subr.mxu0 0.0
    %933 = vmatpush1.msra.mxu0 %v906
    %934 = vmatprep.subr.mxu0 0.0
    %935 = vmatpush1.msra.mxu0 %v907
    %936 = vmatprep.subr.mxu0 0.0
    %937 = vmatpush1.msra.mxu0 %v908
    %938 = vmatprep.subr.mxu0 0.0
    %939 = vmatpush1.msra.mxu0 %v909
    %940 = vmatprep.subr.mxu0 0.0
    %941 = vmatpush1.msra.mxu0 %v910
    %942 = vmatprep.subr.mxu0 0.0
    %943 = vmatpush1.msra.mxu0 %v911
    %944 = vmatprep.subr.mxu0 0.0
    %945 = vmatpush1.msra.mxu0 %v912
    %946 = vmatprep.subr.mxu0 0.0
    %947 = vmatpush1.msra.mxu0 %v913
    %948 = vmatprep.subr.mxu0 0.0
    %949 = vmatpush1.msra.mxu0 %v914
    %950 = vmatprep.subr.mxu0 0.0
    %951 = vmatpush1.msra.mxu0 %v915
    %952 = vmatprep.subr.mxu0 0.0
    %953 = vmatpush1.msra.mxu0 %v916
    %954 = vmatprep.subr.mxu0 0.0
    %955 = vmatpush1.msra.mxu0 %v917
    %956 = vmatprep.subr.mxu0 0.0
    %957 = vmatpush1.msra.mxu0 %v918
    %958 = vmatprep.subr.mxu0 0.0
    %959 = vmatpush1.msra.mxu0 0.0
    %960 = vmatprep.subr.mxu0 0.0
    %961 = vmatpush1.msra.mxu0 0.0
    %962 = vmatprep.subr.mxu0 0.0
    %963 = vmatpush1.msra.mxu0 0.0
    %964 = vmatprep.subr.mxu0 0.0
    %965 = vmatpush1.msra.mxu0 0.0
    %966 = vmatprep.subr.mxu0 0.0
    %967 = vmatpush1.msra.mxu0 0.0
    %968 = vmatprep.subr.mxu0 0.0
    %969 = vmatpush1.msra.mxu0 0.0
    %970 = vmatprep.subr.mxu0 0.0
    %971 = vmatpush1.msra.mxu0 0.0
    %972 = vmatprep.subr.mxu0 0.0
    %973 = vmatpush1.msra.mxu0 0.0
    %974 = vmatprep.subr.mxu0 0.0
    %975 = vmatpush1.msra.mxu0 0.0
    %976 = vmatprep.subr.mxu0 0.0
    %977 = vmatpush1.msra.mxu0 0.0
    %978 = vmatprep.subr.mxu0 0.0
    %979 = vmatpush1.msra.mxu0 0.0
    %980 = vmatprep.subr.mxu0 0.0
    %981 = vmatpush1.msra.mxu0 0.0
    %982 = vmatprep.subr.mxu0 0.0
    %983 = vmatpush1.msra.mxu0 0.0
    %984 = vmatprep.subr.mxu0 0.0
    %985 = vmatpush1.msra.mxu0 0.0
    %986 = vmatprep.subr.mxu0 0.0
    %987 = vmatpush1.msra.mxu0 0.0
    %988 = vmatprep.subr.mxu0 0.0
    %989 = vmatpush1.msra.mxu0 0.0
    %990 = vmatprep.mubr.f32.mxu0 0.0
    %991 = vmatmul.mubr.f32.gmra.mrb[0].mxu0 %v902
    %v992 = vpop.f32.mrb[0].mxu0
    %v993 = vadd.f32 %v924, %v992
    %v994 = vpop.f32.mrb[0].mxu0
    %995 = vdwg.mxu0
    %v996 = vadd.f32 %v781, %v993
    %997 = vst.msk [vmem:[#allocation2] sm:$0xff] %vm67, %v996
    // Predicated region
    $region58: #{tpu_custom_call.1} parent=1 // pred_check
      _
    $region59: #{tpu_custom_call.1} parent=1 // pred_check_branch
      %999 = sbr.rel (0) target = $region61
    $region60: #{tpu_custom_call.1} parent=1 // pred_region
      %s1001 = ssub.s32 128, 128
      %1002 = vsyncadd [#allocation3], %s1001
      %s1004 = sshll.u32 [#allocation2], 4
      %s1005 = int_to_ptr.vmem [resolvable:$true] %s1004
      %1007 = dma.vmem_to_hbm [thread:$0]  %s1005, 128, %s14, [#allocation3]
    $region61: #{tpu_custom_call.1} parent=1 // pred_fallthru
      _
    // Predicated region
    $region62: #{tpu_custom_call.1} parent=1 // pred_check
      _
    $region63: #{tpu_custom_call.1} parent=1 // pred_check_branch
      %1009 = sbr.rel (0) target = $region65
    $region64: #{tpu_custom_call.1} parent=1 // pred_region
      %1010 = dma.done [#allocation3], 128
    $region65: #{tpu_custom_call.1} parent=1 // pred_fallthru
      _
    %1011 = vsyncpa [#allocation3], 1

</llo_original>
